<compile_context>
chip_gen: v6e
topology: v6e:2x2x1
jax: 0.10.0
libtpu: 0.0.40
codegen_flags: <defaults>
</compile_context>

<pallas_src>
import functools
import math

import jax
import jax.numpy as jnp
from jax.experimental import pallas as pl
from jax.experimental.pallas import tpu as pltpu


# ---------------------------------------------------------------------------
# Kernels
# ---------------------------------------------------------------------------
def _swiglu_kernel_split(x1_ref, x2_ref, o_ref, *, approx: bool):
    """Fast path: x1 / x2 arrive as two separate lane-dense VMEM tiles."""
    x1 = x1_ref[...].astype(jnp.float32)
    x2 = x2_ref[...].astype(jnp.float32)
    # silu(x2) = x2 / (1 + exp(-x2)); exp goes to the EUP (free slot in a
    # memory-bound kernel).  approx=True puts the reciprocal on the EUP too.
    denom = 1.0 + jnp.exp(-x2)
    sig = pl.reciprocal(denom, approx=True) if approx else 1.0 / denom
    o_ref[...] = (x1 * x2 * sig).astype(o_ref.dtype)


def _swiglu_kernel_fused(x_ref, o_ref, *, approx: bool):
    """Fallback for non-128-aligned hidden: full 2h-wide block, split in-kernel."""
    h = o_ref.shape[-1]
    x1 = x_ref[:, :h].astype(jnp.float32)
    x2 = x_ref[:, h:].astype(jnp.float32)
    denom = 1.0 + jnp.exp(-x2)
    sig = pl.reciprocal(denom, approx=True) if approx else 1.0 / denom
    o_ref[...] = (x1 * x2 * sig).astype(o_ref.dtype)


# ---------------------------------------------------------------------------
# Tile sizing helpers
# ---------------------------------------------------------------------------
def _default_block_bytes() -> int:
    """Per-block byte budget; 6 live buffers (x1/x2/out, double-buffered) must fit VMEM."""
    try:
        vmem = pltpu.get_tpu_info().vmem_capacity_bytes
    except Exception:
        vmem = 64 * 1024 * 1024  # conservative: v7x has 64 MiB per TensorCore
    if vmem >= 96 * 1024 * 1024:      # v5e / v6e (128 MiB): 6 x 8 MiB ~= 48 MiB
        return 8 * 1024 * 1024
    return 4 * 1024 * 1024            # v7x (64 MiB/TC): 6 x 4 MiB ~= 24 MiB


def _largest_dividing_tile(h: int, target: int) -> int:
    """Largest multiple of 128 that divides h and is <= target (requires h % 128 == 0)."""
    best = 128
    t = 128
    upper = min(target, h)
    while t <= upper:
        if h % t == 0:
            best = t
        t += 128
    return best


# ---------------------------------------------------------------------------
# Wrapper
# ---------------------------------------------------------------------------
def swiglu(
    x: jax.Array,
    *,
    block_bytes: int | None = None,
    tile_rows: int | None = None,
    h_tile: int | None = None,
    approx_sigmoid: bool = False,
) -> jax.Array:
    """x: (..., 2*hidden) -> (..., hidden), computes x1 * silu(x2)."""
    *lead, two_h = x.shape
    assert two_h % 2 == 0, "last dim must be even"
    h = two_h // 2

    rows = math.prod(lead) if lead else 1
    x2d = x.reshape(rows, two_h)

    itemsize = x.dtype.itemsize
    row_align = max(8, 32 // itemsize)        # full packed sublanes: f32 8, bf16 16, fp8 32
    if block_bytes is None:
        block_bytes = _default_block_bytes()
    target_elems = max(block_bytes // itemsize, row_align * 128)

    out_shape = jax.ShapeDtypeStruct((rows, h), x.dtype)
    MIB = 1024 * 1024

    if h % 128 == 0:
        # ---- fast path: 2-D grid, split x1 / x2 BlockSpecs ------------------
        if h_tile is None:
            # Aim for >= 8 KiB contiguous bytes per DMA'd row segment.
            seg_target = max(128, min(h, 8192 // itemsize))
            ht = _largest_dividing_tile(h, seg_target)
            # Degenerate factorisation (e.g. h = 17*128): instead of 128-wide
            # blocks and tiny strided DMA rows, take the full hidden width and
            # let the row tile shrink to keep the byte budget.
            if ht < min(h, 1024) and row_align * h <= target_elems:
                ht = h
        else:
            ht = h_tile
        assert h % ht == 0 and ht % 128 == 0, (
            "hidden tile must be a 128-multiple divisor of h (x2 offset trick)")
        n_hblk = h // ht

        if tile_rows is None:
            tr = max(row_align, (target_elems // ht) // row_align * row_align)
        else:
            tr = tile_rows
        tr = min(rows, tr)

        grid = (pl.cdiv(rows, tr), n_hblk)   # ragged last row block -> masked boundary
        footprint = 6 * tr * ht * itemsize   # (x1 + x2 + out) x double-buffered

        x1_spec = pl.BlockSpec((tr, ht), lambda i, j: (i, j))
        # x2 lives in columns [h, 2h): shift the hidden *block* index by n_hblk
        # (correct because ht divides h exactly -- asserted above).
        x2_spec = pl.BlockSpec((tr, ht), lambda i, j: (i, j + n_hblk))
        o_spec = pl.BlockSpec((tr, ht), lambda i, j: (i, j))

        out2d = pl.pallas_call(
            functools.partial(_swiglu_kernel_split, approx=approx_sigmoid),
            out_shape=out_shape,
            grid=grid,
            in_specs=[x1_spec, x2_spec],
            out_specs=o_spec,
            compiler_params=pltpu.CompilerParams(
                # TODO(synk): profile on v7x to confirm "parallel" shards the row
                # axis across both TensorCores; if not, switch to
                # pltpu.CORE_PARALLEL / an explicit per-core split.
                dimension_semantics=("parallel", "parallel"),
                vmem_limit_bytes=max(32 * MIB, footprint + 8 * MIB),
            ),
        )(x2d, x2d)
    else:
        # ---- fallback: full 2h-wide block (legal: equals full array dim) ----
        if tile_rows is None:
            tr = max(row_align, (target_elems // two_h) // row_align * row_align)
        else:
            tr = tile_rows
        tr = min(rows, tr)

        grid = (pl.cdiv(rows, tr),)
        footprint = 6 * tr * h * itemsize    # 2*(tr,2h) inputs + 2*(tr,h) outputs

        out2d = pl.pallas_call(
            functools.partial(_swiglu_kernel_fused, approx=approx_sigmoid),
            out_shape=out_shape,
            grid=grid,
            in_specs=[pl.BlockSpec((tr, two_h), lambda i: (i, 0))],
            out_specs=pl.BlockSpec((tr, h), lambda i: (i, 0)),
            compiler_params=pltpu.CompilerParams(
                dimension_semantics=("parallel",),
                vmem_limit_bytes=max(32 * MIB, footprint + 8 * MIB),
            ),
        )(x2d)

    return out2d.reshape(*lead, h)


# ---------------------------------------------------------------------------
# Self-test
# ---------------------------------------------------------------------------
if __name__ == "__main__":
    key = jax.random.PRNGKey(0)
    k1, k2, k3 = jax.random.split(key, 3)

    def ref_swiglu(x):
        xf = x.astype(jnp.float32)
        x1, x2 = jnp.split(xf, 2, axis=-1)
        return x1 * (x2 * jax.nn.sigmoid(x2))

    # Test 1: small, non-128-aligned hidden (=32) -> fused fallback path.
    x_small = jax.random.normal(k1, (2, 8, 64), dtype=jnp.float32)
    out_small = jax.block_until_ready(swiglu(x_small))
    assert out_small.shape == (2, 8, 32)
    assert jnp.allclose(out_small, ref_swiglu(x_small), atol=1e-5, rtol=1e-5)

    # Test 2: 128-aligned hidden (=256), bf16, fast path with EUP-approx reciprocal.
    x_big = jax.random.normal(k2, (2, 64, 512), dtype=jnp.bfloat16)
    out_big = jax.block_until_ready(swiglu(x_big, approx_sigmoid=True))
    assert out_big.shape == (2, 64, 256) and out_big.dtype == jnp.bfloat16
    assert jnp.allclose(out_big.astype(jnp.float32), ref_swiglu(x_big),
                        atol=2e-2, rtol=2e-2)

    # Test 3: awkward 128-aligned hidden (h = 17*128) -> full-h tile path.
    x_awk = jax.random.normal(k3, (16, 2 * 17 * 128), dtype=jnp.float32)
    out_awk = jax.block_until_ready(swiglu(x_awk))
    assert out_awk.shape == (16, 17 * 128)
    assert jnp.allclose(out_awk, ref_swiglu(x_awk), atol=1e-5, rtol=1e-5)

    print("KERNEL_OK")
</pallas_src>

<mosaic_0001>
module attributes {stable_mosaic.version = 11 : i64} {
  func.func @_swiglu_kernel_fused(%arg0: i32, %arg1: memref<16x64xf32, #tpu.memory_space<vmem>>, %arg2: memref<16x32xf32, #tpu.memory_space<vmem>>) attributes {dimension_semantics = [#tpu.dimension_semantics<parallel>], iteration_bounds = array<i64: 1>, scalar_prefetch = 0 : i64, scratch_operands = 0 : i64, tpu.core_type = #tpu.core_type<tc>, window_params = [{transform_indices = @transform_0, window_bounds = array<i64: 16, 64>}, {transform_indices = @transform_1, window_bounds = array<i64: 16, 32>}]} {
    %c0 = arith.constant 0 : index
    %c0_0 = arith.constant 0 : index
    %0 = vector.load %arg1[%c0, %c0_0] : memref<16x64xf32, #tpu.memory_space<vmem>>, vector<16x32xf32>
    %c0_1 = arith.constant 0 : index
    %c32 = arith.constant 32 : index
    %1 = vector.load %arg1[%c0_1, %c32] : memref<16x64xf32, #tpu.memory_space<vmem>>, vector<16x32xf32>
    %cst = arith.constant 0.000000e+00 : f32
    %2 = vector.broadcast %cst : f32 to vector<16x32xf32>
    %3 = arith.subf %2, %1 : vector<16x32xf32>
    %4 = math.exp %3 : vector<16x32xf32>
    %cst_2 = arith.constant 1.000000e+00 : f32
    %5 = vector.broadcast %cst_2 : f32 to vector<16x32xf32>
    %6 = arith.addf %5, %4 : vector<16x32xf32>
    %cst_3 = arith.constant 1.000000e+00 : f32
    %7 = vector.broadcast %cst_3 : f32 to vector<16x32xf32>
    %8 = arith.divf %7, %6 : vector<16x32xf32>
    %9 = arith.mulf %0, %1 : vector<16x32xf32>
    %10 = arith.mulf %9, %8 : vector<16x32xf32>
    %c0_4 = arith.constant 0 : index
    %c0_5 = arith.constant 0 : index
    %11 = vector.load %arg2[%c0_4, %c0_5] : memref<16x32xf32, #tpu.memory_space<vmem>>, vector<16x32xf32>
    tpu.vector_store %arg2[%c0_4, %c0_5], %10 {strides = array<i32>} : memref<16x32xf32, #tpu.memory_space<vmem>>, vector<16x32xf32>,
    return
  }
  func.func @transform_0(%arg0: i32) -> (i32, i32) {
    %c0_i32 = arith.constant 0 : i32
    %c0_i32_0 = arith.constant 0 : i32
    return %arg0, %c0_i32 : i32, i32
  }
  func.func @transform_1(%arg0: i32) -> (i32, i32) {
    %c0_i32 = arith.constant 0 : i32
    %c0_i32_0 = arith.constant 0 : i32
    return %arg0, %c0_i32 : i32, i32
  }
}

</mosaic_0001>

<llo_original>
// kernel: tpu_custom_call.1
$region0: #{tpu_custom_call.1}
  #allocation0 [shape = 'u32[]', space=smem, size = 0x4, offset = 0x4, fixed_abs, tag = 'smem constant byte address 0x4 - core index']
  #allocation1 [shape = 'u32[144,128]{1,0:T(1,128)}', space=vmem, size = 0x12000, scoped, tag = 'internal scratch']
  %s0 = inlined_call_operand.hbm [shape: f32[16,64], index: 0, kind: input, shape index: {}]
  %s1 = inlined_call_operand.hbm [shape: f32[16,32], index: 1, kind: output, shape index: {}]
  %s2 = sld [smem:[#allocation0]]
  $region18: #{tpu_custom_call.1} parent=0
    _
  %s4 = ssub.s32 1, %s2
  %s5 = scalar_select 0, %s4, %s2
  $region1: #{tpu_custom_call.1} parent=0
    #allocation2 [shape = 'u8[8192]{0}', space=vmem, size = 0x2000, scoped, tag = 'input window, operand 0, single buffered']
    #allocation3 [shape = 's32[1]{0}', space=sflag, size = 0x4, scoped, tag = 'scoped memory for tpu_custom_call.1']
    #allocation4 [shape = 's32[1]{0}', space=sflag, size = 0x4, scoped, tag = 'scoped memory for tpu_custom_call.1']
    #allocation5 [shape = 'u8[8192]{0}', space=vmem, size = 0x2000, scoped, tag = 'output window, operand 0, single buffered']
    %6 = vsyncpa [#allocation3], 0
    %7 = vsyncpa [#allocation4], 0
    // Predicated region
    $region2: #{tpu_custom_call.1} parent=1 // pred_check
      _
    $region3: #{tpu_custom_call.1} parent=1 // pred_check_branch
      %9 = sbr.rel (0) target = $region5
    $region4: #{tpu_custom_call.1} parent=1 // pred_region
      %s11 = ssub.s32 256, 256
      %12 = vsyncadd [#allocation3], %s11
      %s13 = sshll.u32 [#allocation2], 4
      %s14 = int_to_ptr.vmem [resolvable:$true] %s13
      %19 = dma.hbm_to_vmem [thread:$0]  %s0, 256, %s14, [#allocation3], 128, 128, 8
    $region5: #{tpu_custom_call.1} parent=1 // pred_fallthru
      _
    // Predicated region
    $region6: #{tpu_custom_call.1} parent=1 // pred_check
      _
    $region7: #{tpu_custom_call.1} parent=1 // pred_check_branch
      %21 = sbr.rel (0) target = $region9
    $region8: #{tpu_custom_call.1} parent=1 // pred_region
      %22 = dma.done [#allocation3], 256
    $region9: #{tpu_custom_call.1} parent=1 // pred_fallthru
      _
    %v23 = vld [vmem:[#allocation2] sm:$0xff]
    %v24 = vld [vmem:[#allocation2 + $0x8] sm:$0xff]
    %v25 = vsub.f32 0.0, %v23
    %v26 = vsub.f32 0.0, %v24
    %v27 = vmul.f32 %v25, 1.442695
    %v28 = vpow.pop %v27
    %v29 = vmul.f32 %v26, 1.442695
    %v30 = vpow.pop %v29
    %v31 = vadd.f32 %v28, 1.0
    %v32 = vadd.f32 %v30, 1.0
    %v33 = vrcp.pop %v31
    %v34 = vmul.f32 1.0, %v33
    %v35 = vrcp.pop %v32
    %v36 = vmul.f32 1.0, %v35
    %39 = vrot.lane.b32.xlu0 %v23, 96
    %v40 = vpop.permute.xlu0 %39
    %41 = vrot.lane.b32.xlu0 %v24, 96
    %v42 = vpop.permute.xlu0 %41
    %v45 = vmul.f32 %v23, %v40
    %v46 = vmul.f32 %v24, %v42
    %49 = vrot.lane.b32.xlu0 %v34, 96
    %v50 = vpop.permute.xlu0 %49
    %51 = vrot.lane.b32.xlu0 %v36, 96
    %v52 = vpop.permute.xlu0 %51
    %v55 = vmul.f32 %v45, %v50
    %v56 = vmul.f32 %v46, %v52
    %vm57 = vcmask 261120
    %58 = vst.msk [vmem:[#allocation5] sm:$0xff] %vm57, %v55
    %59 = vst.msk [vmem:[#allocation5 + $0x8] sm:$0xff] %vm57, %v56
    // Predicated region
    $region10: #{tpu_custom_call.1} parent=1 // pred_check
      _
    $region11: #{tpu_custom_call.1} parent=1 // pred_check_branch
      %61 = sbr.rel (0) target = $region13
    $region12: #{tpu_custom_call.1} parent=1 // pred_region
      %s63 = ssub.s32 256, 256
      %64 = vsyncadd [#allocation4], %s63
      %s65 = sshll.u32 [#allocation5], 4
      %s66 = int_to_ptr.vmem [resolvable:$true] %s65
      %71 = dma.vmem_to_hbm [thread:$0]  %s66, 256, %s1, [#allocation4], 128, 128, 8
    $region13: #{tpu_custom_call.1} parent=1 // pred_fallthru
      _
    // Predicated region
    $region14: #{tpu_custom_call.1} parent=1 // pred_check
      _
    $region15: #{tpu_custom_call.1} parent=1 // pred_check_branch
      %73 = sbr.rel (0) target = $region17
    $region16: #{tpu_custom_call.1} parent=1 // pred_region
      %74 = dma.done [#allocation4], 256
    $region17: #{tpu_custom_call.1} parent=1 // pred_fallthru
      _
    %75 = vsyncpa [#allocation3], 1
    %76 = vsyncpa [#allocation4], 1

</llo_original>
